<compile_context>
chip_gen: v7x
topology: tpu7x:2x2x1
jax: 0.10.0
libtpu: 0.0.40
codegen_flags: <defaults>
</compile_context>

<pallas_src>
import jax
import jax.numpy as jnp
from jax.experimental import pallas as pl
from jax.experimental.pallas import tpu as pltpu


def _sigmoid_kernel(x_ref, o_ref):
    # Elementwise sigmoid on the whole VMEM tile (VPU + EUP for exp).
    o_ref[...] = jax.nn.sigmoid(x_ref[...])


def pallas_sigmoid(x: jax.Array) -> jax.Array:
    """Elementwise sigmoid, exact semantics of torch.nn.Sigmoid()."""
    orig_shape = x.shape
    n_elems = x.size
    if n_elems == 0:
        return x
    itemsize = jnp.dtype(x.dtype).itemsize

    # --- Choose a wide lane-dense slab width (largest multiple of 128 that
    # --- divides the element count; fall back to padding otherwise). ---------
    lane = None
    for cand in (2048, 1024, 512, 256, 128):
        if n_elems % cand == 0:
            lane = cand
            break

    x_flat = jnp.ravel(x)
    if lane is None:
        # Remainder path only: pad flat length up to a multiple of a wide lane
        # count (zeros -> sigmoid(0)=0.5, sliced off below).
        lane = 1024
        rows = pl.cdiv(n_elems, lane)
        x_flat = jnp.pad(x_flat, (0, rows * lane - n_elems))
        needs_slice = True
    else:
        rows = n_elems // lane
        needs_slice = False

    x2d = x_flat.reshape(rows, lane)

    # --- ~2 MiB blocks; rows-per-block a multiple of 32 (valid sublane tiling
    # --- for f32/bf16/int8). A block equal to the full row extent is always
    # --- legal, so small inputs collapse to a single block. -------------------
    target_block_bytes = 2 << 20
    tr = max(32, (target_block_bytes // (lane * itemsize)) // 32 * 32)
    if tr >= rows:
        tr = rows
    grid = (pl.cdiv(rows, tr),)

    n_bytes = n_elems * itemsize
    cost = pl.CostEstimate(
        flops=4 * n_elems,
        transcendentals=n_elems,
        bytes_accessed=2 * n_bytes,
    )

    out2d = pl.pallas_call(
        _sigmoid_kernel,
        out_shape=jax.ShapeDtypeStruct((rows, lane), x2d.dtype),
        grid_spec=pltpu.PrefetchScalarGridSpec(
            num_scalar_prefetch=0,
            grid=grid,
            in_specs=[pl.BlockSpec((tr, lane), lambda i: (i, 0))],
            out_specs=pl.BlockSpec((tr, lane), lambda i: (i, 0)),
        ),
        compiler_params=pltpu.CompilerParams(
            dimension_semantics=("parallel",),
        ),
        cost_estimate=cost,
    )(x2d)

    out_flat = out2d.reshape(-1)
    if needs_slice:
        out_flat = out_flat[:n_elems]
    return out_flat.reshape(orig_shape)


if __name__ == "__main__":
    key = jax.random.PRNGKey(0)
    # NCHW input, e.g. batch=2, channels=4, spatial=16x16
    x = jax.random.normal(key, (2, 4, 16, 16), dtype=jnp.float32)

    out = pallas_sigmoid(x)
    out = jax.block_until_ready(out)

    # Correctness check against plain JAX reference.
    ref = jax.nn.sigmoid(x)
    assert out.shape == x.shape
    assert out.dtype == x.dtype
    assert jnp.allclose(out, ref, atol=1e-6, rtol=1e-6), "mismatch vs reference"

    # Also exercise a shape whose element count is NOT a multiple of 128
    # (remainder / padding path).
    x2 = jax.random.normal(jax.random.PRNGKey(1), (3, 5, 7, 11), dtype=jnp.float32)
    out2 = jax.block_until_ready(pallas_sigmoid(x2))
    assert jnp.allclose(out2, jax.nn.sigmoid(x2), atol=1e-6, rtol=1e-6)

    print("KERNEL_OK")
</pallas_src>

<mosaic_0001>
module attributes {stable_mosaic.version = 11 : i64} {
  func.func @_sigmoid_kernel(%arg0: i32, %arg1: memref<1x2048xf32, #tpu.memory_space<vmem>>, %arg2: memref<1x2048xf32, #tpu.memory_space<vmem>>) attributes {dimension_semantics = [#tpu.dimension_semantics<parallel>], iteration_bounds = array<i64: 1>, scalar_prefetch = 0 : i64, scratch_operands = 0 : i64, tpu.core_type = #tpu.core_type<tc>, window_params = [{transform_indices = @transform_0, window_bounds = array<i64: 1, 2048>}, {transform_indices = @transform_1, window_bounds = array<i64: 1, 2048>}]} {
    %c0 = arith.constant 0 : index
    %c0_0 = arith.constant 0 : index
    %0 = vector.load %arg1[%c0, %c0_0] : memref<1x2048xf32, #tpu.memory_space<vmem>>, vector<1x2048xf32>
    %1 = arith.negf %0 : vector<1x2048xf32>
    %2 = math.exp %1 : vector<1x2048xf32>
    %cst = arith.constant 1.000000e+00 : f32
    %3 = vector.broadcast %cst : f32 to vector<1x2048xf32>
    %4 = arith.addf %3, %2 : vector<1x2048xf32>
    %5 = arith.divf %3, %4 : vector<1x2048xf32>
    %c0_1 = arith.constant 0 : index
    %c0_2 = arith.constant 0 : index
    %6 = vector.load %arg2[%c0_1, %c0_2] : memref<1x2048xf32, #tpu.memory_space<vmem>>, vector<1x2048xf32>
    tpu.vector_store %arg2[%c0_1, %c0_2], %5 {strides = array<i32>} : memref<1x2048xf32, #tpu.memory_space<vmem>>, vector<1x2048xf32>,
    return
  }
  func.func @transform_0(%arg0: i32) -> (i32, i32) {
    %c0_i32 = arith.constant 0 : i32
    %c0_i32_0 = arith.constant 0 : i32
    return %arg0, %c0_i32 : i32, i32
  }
  func.func @transform_1(%arg0: i32) -> (i32, i32) {
    %c0_i32 = arith.constant 0 : i32
    %c0_i32_0 = arith.constant 0 : i32
    return %arg0, %c0_i32 : i32, i32
  }
}

</mosaic_0001>

<llo_original>
// kernel: tpu_custom_call.1
$region0: #{tpu_custom_call.1}
  #allocation0 [shape = 'u32[]', space=smem, size = 0x4, offset = 0x4, fixed_abs, tag = 'smem constant byte address 0x4 - core index']
  #allocation1 [shape = 'u32[144,128]{1,0:T(1,128)}', space=vmem, size = 0x12000, scoped, tag = 'internal scratch']
  %s0 = inlined_call_operand.hbm [shape: f32[1,2048], index: 0, kind: input, shape index: {}]
  %s1 = inlined_call_operand.hbm [shape: f32[1,2048], index: 1, kind: output, shape index: {}]
  %s2 = sld [smem:[#allocation0]]
  $region18: #{tpu_custom_call.1} parent=0
    _
  %s4 = ssub.s32 1, %s2
  %s5 = scalar_select 0, %s4, %s2
  $region1: #{tpu_custom_call.1} parent=0
    #allocation2 [shape = 'u8[8192]{0}', space=vmem, size = 0x2000, scoped, tag = 'input window, operand 0, single buffered']
    #allocation3 [shape = 's32[1]{0}', space=sflag, size = 0x4, scoped, tag = 'scoped memory for tpu_custom_call.1']
    #allocation4 [shape = 's32[1]{0}', space=sflag, size = 0x4, scoped, tag = 'scoped memory for tpu_custom_call.1']
    #allocation5 [shape = 'u8[8192]{0}', space=vmem, size = 0x2000, scoped, tag = 'output window, operand 0, single buffered']
    %6 = vsyncpa [#allocation3], 0
    %7 = vsyncpa [#allocation4], 0
    // Predicated region
    $region2: #{tpu_custom_call.1} parent=1 // pred_check
      _
    $region3: #{tpu_custom_call.1} parent=1 // pred_check_branch
      %9 = sbr.rel (0) target = $region5
    $region4: #{tpu_custom_call.1} parent=1 // pred_region
      %s11 = ssub.s32 256, 256
      %12 = vsyncadd [#allocation3], %s11
      %s14 = sshll.u32 [#allocation2], 4
      %s15 = int_to_ptr.vmem [resolvable:$true] %s14
      %17 = dma.hbm_to_vmem [thread:$0]  %s0, 256, %s15, [#allocation3]
    $region5: #{tpu_custom_call.1} parent=1 // pred_fallthru
      _
    // Predicated region
    $region6: #{tpu_custom_call.1} parent=1 // pred_check
      _
    $region7: #{tpu_custom_call.1} parent=1 // pred_check_branch
      %19 = sbr.rel (0) target = $region9
    $region8: #{tpu_custom_call.1} parent=1 // pred_region
      %20 = dma.done [#allocation3], 256
    $region9: #{tpu_custom_call.1} parent=1 // pred_fallthru
      _
    %v21 = vld [vmem:[#allocation2] sm:$0xff]
    %v22 = vld [vmem:[#allocation2 + $0x8] sm:$0xff]
    %v23 = vxor.u32 %v21, 2147483648
    %v24 = vxor.u32 %v22, 2147483648
    %v25 = vmul.f32 %v23, 1.442695
    %v26 = vpow.pop %v25
    %v27 = vmul.f32 %v24, 1.442695
    %v28 = vpow.pop %v27
    %v29 = vadd.f32 %v26, 1.0
    %v30 = vadd.f32 %v28, 1.0
    %v31 = vrcp.pop %v29
    %v32 = vmul.f32 1.0, %v31
    %v33 = vrcp.pop %v30
    %v34 = vmul.f32 1.0, %v33
    %35 = vst [vmem:[#allocation5] sm:$0xff] %v32
    %36 = vst [vmem:[#allocation5 + $0x8] sm:$0xff] %v34
    // Predicated region
    $region10: #{tpu_custom_call.1} parent=1 // pred_check
      _
    $region11: #{tpu_custom_call.1} parent=1 // pred_check_branch
      %38 = sbr.rel (0) target = $region13
    $region12: #{tpu_custom_call.1} parent=1 // pred_region
      %s40 = ssub.s32 256, 256
      %41 = vsyncadd [#allocation4], %s40
      %s43 = sshll.u32 [#allocation5], 4
      %s44 = int_to_ptr.vmem [resolvable:$true] %s43
      %46 = dma.vmem_to_hbm [thread:$0]  %s44, 256, %s1, [#allocation4]
    $region13: #{tpu_custom_call.1} parent=1 // pred_fallthru
      _
    // Predicated region
    $region14: #{tpu_custom_call.1} parent=1 // pred_check
      _
    $region15: #{tpu_custom_call.1} parent=1 // pred_check_branch
      %48 = sbr.rel (0) target = $region17
    $region16: #{tpu_custom_call.1} parent=1 // pred_region
      %49 = dma.done [#allocation4], 256
    $region17: #{tpu_custom_call.1} parent=1 // pred_fallthru
      _
    %50 = vsyncpa [#allocation3], 1
    %51 = vsyncpa [#allocation4], 1

</llo_original>
